<compile_context>
chip_gen: v7x
topology: tpu7x:2x2x1
jax: 0.10.0
libtpu: 0.0.40
codegen_flags: <defaults>
</compile_context>

<pallas_src>
import functools

import jax
import jax.numpy as jnp
from jax.experimental import pallas as pl
from jax.experimental.pallas import tpu as pltpu


def _round_up(x, m):
    return ((x + m - 1) // m) * m


def _largest_aligned_divisor(dim, cap, align=128):
    """Largest multiple of `align` that divides `dim` (dim % align == 0) and is <= cap."""
    best = align
    t = align
    limit = min(cap, dim)
    while t <= limit:
        if dim % t == 0:
            best = t
        t += align
    return best


# ----------------------------- kernels -------------------------------------


def _linear_relu_single_k_kernel(x_ref, w_ref, b_ref, o_ref):
    # Whole contraction in one MXU pass: x [tm, K] @ w [K, tn], fused bias + ReLU.
    acc = jnp.dot(x_ref[...], w_ref[...], preferred_element_type=jnp.float32)
    acc = acc + b_ref[...].astype(jnp.float32)
    o_ref[...] = jnp.maximum(acc, 0.0).astype(o_ref.dtype)


def _linear_relu_multi_k_f32out_kernel(x_ref, w_ref, b_ref, o_ref):
    # f32 output: accumulate directly into the resident output block (no scratch).
    k = pl.program_id(2)

    @pl.when(k == 0)
    def _():
        o_ref[...] = jnp.zeros_like(o_ref)

    o_ref[...] += jnp.dot(x_ref[...], w_ref[...], preferred_element_type=jnp.float32)

    @pl.when(k == pl.num_programs(2) - 1)
    def _():
        o_ref[...] = jnp.maximum(o_ref[...] + b_ref[...].astype(jnp.float32), 0.0)


def _linear_relu_multi_k_kernel(x_ref, w_ref, b_ref, o_ref, acc_ref):
    # Narrow output dtype: f32 VMEM accumulator, cast in the epilogue.
    k = pl.program_id(2)

    @pl.when(k == 0)
    def _():
        acc_ref[...] = jnp.zeros_like(acc_ref)

    acc_ref[...] += jnp.dot(x_ref[...], w_ref[...], preferred_element_type=jnp.float32)

    @pl.when(k == pl.num_programs(2) - 1)
    def _():
        y = acc_ref[...] + b_ref[...].astype(jnp.float32)
        o_ref[...] = jnp.maximum(y, 0.0).astype(o_ref.dtype)


# ----------------------------- wrapper --------------------------------------


def prepare_linear_block_params(weight, bias, *, compute_dtype=jnp.bfloat16):
    """One-time parameter prep (do at init time, NOT per forward).

    weight: [out_dim, in_dim]  (PyTorch nn.Linear layout)
    bias:   [out_dim]
    Returns (w_t, b_p, out_dim) with
      w_t: [K_pad, N_pad] compute_dtype  (padded + transposed: MXU-natural layout)
      b_p: [1, N_pad] float32
    """
    out_dim, in_dim = weight.shape
    K = _round_up(in_dim, 128)
    N = _round_up(out_dim, 128)
    w_t = jnp.pad(weight, ((0, N - out_dim), (0, K - in_dim))).T  # [K, N]
    w_t = w_t.astype(compute_dtype)
    b_p = jnp.pad(bias, (0, N - out_dim)).astype(jnp.float32).reshape(1, N)
    return w_t, b_p, out_dim


@functools.partial(
    jax.jit,
    static_argnames=("out_dim", "tm_cap", "tn_cap", "tk_cap", "compute_dtype"),
)
def linear_block_forward(
    x,
    w_t,
    b_p,
    *,
    out_dim,
    tm_cap=1024,
    tn_cap=512,
    tk_cap=1024,
    compute_dtype=jnp.bfloat16,
):
    """Forward of LinearBlock: ReLU(x @ W.T + b), dropout = 0.

    x:   [B, in_dim]
    w_t: [K_pad, N_pad]  (from prepare_linear_block_params)
    b_p: [1, N_pad]
    """
    B, in_dim = x.shape
    K, N = w_t.shape
    assert K >= in_dim and K % 128 == 0 and N % 128 == 0
    out_dtype = x.dtype

    # Batch tiling: 16-aligned (bf16 sublane packing). Let tm span the whole
    # padded batch when it fits the cap so the weight streams from HBM exactly once.
    M = _round_up(B, 16)
    if M <= tm_cap:
        tm = M
    else:
        tm = tm_cap
        M = _round_up(B, tm)

    # N / K tiles: largest 128-multiple that divides the padded dim (zero extra padding).
    tn = _largest_aligned_divisor(N, tn_cap, 128)
    tk = _largest_aligned_divisor(K, tk_cap, 128)

    # v7x megacore: if the parallel grid collapsed to a single tile and N allows,
    # split N so both TensorCores get work.
    if (M // tm) * (N // tn) == 1 and N // 128 >= 2:
        tn = _largest_aligned_divisor(N, max(128, tn // 2), 128)

    # Pad/cast only the activation on the hot path (weight is pre-prepared).
    x_p = x
    if M != B or K != in_dim:
        x_p = jnp.pad(x, ((0, M - B), (0, K - in_dim)))
    x_p = x_p.astype(compute_dtype)
    w_c = w_t.astype(compute_dtype)  # no-op if already prepared in compute_dtype

    n_k = K // tk
    compiler_params = pltpu.CompilerParams(
        dimension_semantics=("parallel", "parallel")
        + (("arbitrary",) if n_k > 1 else ()),
        vmem_limit_bytes=48 << 20,
    )

    if n_k == 1:
        # Single-K path: no accumulator, no reduction axis; x DMA'd once per M tile.
        out = pl.pallas_call(
            _linear_relu_single_k_kernel,
            out_shape=jax.ShapeDtypeStruct((M, N), out_dtype),
            grid_spec=pltpu.PrefetchScalarGridSpec(
                num_scalar_prefetch=0,
                grid=(M // tm, N // tn),
                in_specs=[
                    pl.BlockSpec((tm, K), lambda i, j: (i, 0)),   # x tile (constant over j)
                    pl.BlockSpec((K, tn), lambda i, j: (0, j)),   # W.T tile, MXU-natural
                    pl.BlockSpec((1, tn), lambda i, j: (0, j)),   # bias tile
                ],
                out_specs=pl.BlockSpec((tm, tn), lambda i, j: (i, j)),
            ),
            compiler_params=compiler_params,
        )(x_p, w_c, b_p)
    else:
        in_specs = [
            pl.BlockSpec((tm, tk), lambda i, j, k: (i, k)),
            pl.BlockSpec((tk, tn), lambda i, j, k: (k, j)),
            pl.BlockSpec((1, tn), lambda i, j, k: (0, j)),
        ]
        out_specs = pl.BlockSpec((tm, tn), lambda i, j, k: (i, j))
        if out_dtype == jnp.float32:
            kernel = _linear_relu_multi_k_f32out_kernel
            scratch = []
        else:
            kernel = _linear_relu_multi_k_kernel
            scratch = [pltpu.VMEM((tm, tn), jnp.float32)]
        out = pl.pallas_call(
            kernel,
            out_shape=jax.ShapeDtypeStruct((M, N), out_dtype),
            grid_spec=pltpu.PrefetchScalarGridSpec(
                num_scalar_prefetch=0,
                grid=(M // tm, N // tn, n_k),
                in_specs=in_specs,
                out_specs=out_specs,
                scratch_shapes=scratch,
            ),
            compiler_params=compiler_params,
        )(x_p, w_c, b_p)

    # Slice off lane/sublane padding.
    return out[:B, :out_dim]


if __name__ == "__main__":
    # Small shapes consistent with the module: batch=8, input_dim=32, out_dim=16.
    B, IN_DIM, OUT_DIM = 8, 32, 16

    key = jax.random.PRNGKey(0)
    k_x, k_w, k_b = jax.random.split(key, 3)

    # Deterministic param init matching nn.Linear default: U(-1/sqrt(in), 1/sqrt(in)).
    bound = 1.0 / (IN_DIM ** 0.5)
    weight = jax.random.uniform(k_w, (OUT_DIM, IN_DIM), jnp.float32, -bound, bound)
    bias = jax.random.uniform(k_b, (OUT_DIM,), jnp.float32, -bound, bound)
    x = jax.random.normal(k_x, (B, IN_DIM), jnp.float32)

    # One-time parameter prep (pad + transpose + bf16 cast), outside the hot path.
    w_t, b_p, out_dim = prepare_linear_block_params(weight, bias)

    out = linear_block_forward(x, w_t, b_p, out_dim=out_dim)
    out = jax.block_until_ready(out)

    # Reference check (pure JAX, f32). bf16 MXU inputs + f32 accumulation -> small tolerance.
    ref = jnp.maximum(x @ weight.T + bias, 0.0)
    assert out.shape == (B, OUT_DIM)
    assert jnp.allclose(out, ref, atol=3e-2, rtol=3e-2), "mismatch vs reference"

    # TODO(synk): forward_with_noise / PerturbationLpNorm eps bookkeeping is not part of
    # forward() and is intentionally not implemented in the kernel.
    print("KERNEL_OK")
</pallas_src>

<mosaic_0001>
module attributes {stable_mosaic.version = 11 : i64} {
  func.func @_linear_relu_single_k_kernel(%arg0: i32, %arg1: i32, %arg2: memref<16x128xbf16, #tpu.memory_space<vmem>>, %arg3: memref<128x128xbf16, #tpu.memory_space<vmem>>, %arg4: memref<1x128xf32, #tpu.memory_space<vmem>>, %arg5: memref<16x128xf32, #tpu.memory_space<vmem>>) attributes {dimension_semantics = [#tpu.dimension_semantics<parallel>, #tpu.dimension_semantics<parallel>], iteration_bounds = array<i64: 1, 1>, scalar_prefetch = 0 : i64, scratch_operands = 0 : i64, tpu.core_type = #tpu.core_type<tc>, window_params = [{transform_indices = @transform_0, window_bounds = array<i64: 16, 128>}, {transform_indices = @transform_1, window_bounds = array<i64: 128, 128>}, {transform_indices = @transform_2, window_bounds = array<i64: 1, 128>}, {transform_indices = @transform_3, window_bounds = array<i64: 16, 128>}]} {
    %c0 = arith.constant 0 : index
    %c0_0 = arith.constant 0 : index
    %0 = vector.load %arg2[%c0, %c0_0] : memref<16x128xbf16, #tpu.memory_space<vmem>>, vector<16x128xbf16>
    %c0_1 = arith.constant 0 : index
    %c0_2 = arith.constant 0 : index
    %1 = vector.load %arg3[%c0_1, %c0_2] : memref<128x128xbf16, #tpu.memory_space<vmem>>, vector<128x128xbf16>
    %cst = arith.constant dense<0.000000e+00> : vector<16x128xf32>
    %2 = tpu.matmul %0, %1, %cst {dimension_numbers = #tpu.dot_dimension_numbers<[1], [0], [0], [1], [0, 0, 1, 1], [], []>} : vector<16x128xbf16>, vector<128x128xbf16>, vector<16x128xf32> -> vector<16x128xf32>
    %c0_3 = arith.constant 0 : index
    %c0_4 = arith.constant 0 : index
    %3 = vector.load %arg4[%c0_3, %c0_4] : memref<1x128xf32, #tpu.memory_space<vmem>>, vector<1x128xf32>
    %4 = vector.broadcast %3 : vector<1x128xf32> to vector<16x128xf32>
    %5 = arith.addf %2, %4 : vector<16x128xf32>
    %cst_5 = arith.constant 0.000000e+00 : f32
    %6 = vector.broadcast %cst_5 : f32 to vector<16x128xf32>
    %7 = arith.maximumf %5, %6 : vector<16x128xf32>
    %c0_6 = arith.constant 0 : index
    %c0_7 = arith.constant 0 : index
    %8 = vector.load %arg5[%c0_6, %c0_7] : memref<16x128xf32, #tpu.memory_space<vmem>>, vector<16x128xf32>
    tpu.vector_store %arg5[%c0_6, %c0_7], %7 {strides = array<i32>} : memref<16x128xf32, #tpu.memory_space<vmem>>, vector<16x128xf32>,
    return
  }
  func.func @transform_0(%arg0: i32, %arg1: i32) -> (i32, i32) {
    %c0_i32 = arith.constant 0 : i32
    %c0_i32_0 = arith.constant 0 : i32
    return %arg0, %c0_i32 : i32, i32
  }
  func.func @transform_1(%arg0: i32, %arg1: i32) -> (i32, i32) {
    %c0_i32 = arith.constant 0 : i32
    %c0_i32_0 = arith.constant 0 : i32
    return %c0_i32, %arg1 : i32, i32
  }
  func.func @transform_2(%arg0: i32, %arg1: i32) -> (i32, i32) {
    %c0_i32 = arith.constant 0 : i32
    %c0_i32_0 = arith.constant 0 : i32
    return %c0_i32, %arg1 : i32, i32
  }
  func.func @transform_3(%arg0: i32, %arg1: i32) -> (i32, i32) {
    %c0_i32 = arith.constant 0 : i32
    return %arg0, %arg1 : i32, i32
  }
}

</mosaic_0001>

<llo_original>
// kernel: linear_block_forward.1
$region0: #{linear_block_forward.1}
  #allocation0 [shape = 'u32[]', space=smem, size = 0x4, offset = 0x4, fixed_abs, tag = 'smem constant byte address 0x4 - core index']
  #allocation1 [shape = 'u32[144,128]{1,0:T(1,128)}', space=vmem, size = 0x12000, scoped, tag = 'internal scratch']
  %s0 = inlined_call_operand.vmem [shape: bf16[16,128], index: 0, kind: input, shape index: {}]
  %s1 = inlined_call_operand.hbm [shape: bf16[128,128], index: 1, kind: input, shape index: {}]
  %s2 = inlined_call_operand.vmem [shape: f32[1,128], index: 2, kind: input, shape index: {}]
  %s3 = inlined_call_operand.vmem [shape: f32[16,128], index: 3, kind: output, shape index: {}]
  %s4 = sld [smem:[#allocation0]]
  $region26: #{linear_block_forward.1} parent=0
    _
  %s6 = ssub.s32 1, %s4
  %s7 = scalar_select 0, %s6, %s4
  $region1: #{linear_block_forward.1} parent=0
    #allocation2 [shape = 'u8[32768]{0}', space=vmem, size = 0x8000, scoped, tag = 'input window, operand 1, single buffered']
    #allocation3 [shape = 's32[1]{0}', space=sflag, size = 0x4, scoped, tag = 'scoped memory for linear_block_forward.1']
    %8 = vsyncpa [#allocation3], 0
    // Predicated region
    $region2: #{linear_block_forward.1} parent=1 // pred_check
      _
    $region3: #{linear_block_forward.1} parent=1 // pred_check_branch
      %10 = sbr.rel (0) target = $region5
    $region4: #{linear_block_forward.1} parent=1 // pred_region
      _
    $region5: #{linear_block_forward.1} parent=1 // pred_fallthru
      _
    // Predicated region
    $region6: #{linear_block_forward.1} parent=1 // pred_check
      _
    $region7: #{linear_block_forward.1} parent=1 // pred_check_branch
      %12 = sbr.rel (0) target = $region9
    $region8: #{linear_block_forward.1} parent=1 // pred_region
      %s14 = ssub.s32 1024, 1024
      %15 = vsyncadd [#allocation3], %s14
      %s16 = sshll.u32 [#allocation2], 4
      %s17 = int_to_ptr.vmem [resolvable:$true] %s16
      %22 = dma.hbm_to_vmem [thread:$0]  %s1, 1024, %s17, [#allocation3], 64, 64, 4
    $region9: #{linear_block_forward.1} parent=1 // pred_fallthru
      _
    // Predicated region
    $region10: #{linear_block_forward.1} parent=1 // pred_check
      _
    $region11: #{linear_block_forward.1} parent=1 // pred_check_branch
      %24 = sbr.rel (0) target = $region13
    $region12: #{linear_block_forward.1} parent=1 // pred_region
      _
    $region13: #{linear_block_forward.1} parent=1 // pred_fallthru
      _
    // Predicated region
    $region14: #{linear_block_forward.1} parent=1 // pred_check
      _
    $region15: #{linear_block_forward.1} parent=1 // pred_check_branch
      %26 = sbr.rel (0) target = $region17
    $region16: #{linear_block_forward.1} parent=1 // pred_region
      %27 = dma.done [#allocation3], 1024
    $region17: #{linear_block_forward.1} parent=1 // pred_fallthru
      _
    %v29 = vld [vmem:[%s0] sm:$0xf]
    %v30 = vld [vmem:[%s0 + $0x4] sm:$0xf]
    %v31 = vld [vmem:[#allocation2] sm:$0xf]
    %v32 = vld [vmem:[#allocation2 + $0x4] sm:$0xf]
    %v33 = vld [vmem:[#allocation2 + $0x8] sm:$0xf]
    %v34 = vld [vmem:[#allocation2 + $0xc] sm:$0xf]
    %v35 = vld [vmem:[#allocation2 + $0x10] sm:$0xf]
    %v36 = vld [vmem:[#allocation2 + $0x14] sm:$0xf]
    %v37 = vld [vmem:[#allocation2 + $0x18] sm:$0xf]
    %v38 = vld [vmem:[#allocation2 + $0x1c] sm:$0xf]
    %v39 = vld [vmem:[#allocation2 + $0x20] sm:$0xf]
    %v40 = vld [vmem:[#allocation2 + $0x24] sm:$0xf]
    %v41 = vld [vmem:[#allocation2 + $0x28] sm:$0xf]
    %v42 = vld [vmem:[#allocation2 + $0x2c] sm:$0xf]
    %v43 = vld [vmem:[#allocation2 + $0x30] sm:$0xf]
    %v44 = vld [vmem:[#allocation2 + $0x34] sm:$0xf]
    %v45 = vld [vmem:[#allocation2 + $0x38] sm:$0xf]
    %v46 = vld [vmem:[#allocation2 + $0x3c] sm:$0xf]
    %v47 = vld [vmem:[%s2] sm:$0x1]
    %v49 = vlaneseq
    %v50 = vshrl.u32 %v49, 7
    %v51 = vsub.s32 0, %v50
    %v52 = vrot.slane %v47, %v51
    %v56 = vunpack.c.l.b16 %v29
    %v57 = vunpack.c.l.b16 %v30
    %v58 = vpack.c.b16 %v57, %v56
    %v76 = vunpack.c.l.b16 %v31
    %v77 = vunpack.c.l.b16 %v32
    %v78 = vunpack.c.l.b16 %v33
    %v79 = vunpack.c.l.b16 %v34
    %v80 = vunpack.c.l.b16 %v35
    %v81 = vunpack.c.l.b16 %v36
    %v82 = vunpack.c.l.b16 %v37
    %v83 = vunpack.c.l.b16 %v38
    %v84 = vunpack.c.l.b16 %v39
    %v85 = vunpack.c.l.b16 %v40
    %v86 = vunpack.c.l.b16 %v41
    %v87 = vunpack.c.l.b16 %v42
    %v88 = vunpack.c.l.b16 %v43
    %v89 = vunpack.c.l.b16 %v44
    %v90 = vunpack.c.l.b16 %v45
    %v91 = vunpack.c.l.b16 %v46
    %v92 = vpack.c.b16 %v77, %v76
    %v93 = vpack.c.b16 %v79, %v78
    %v94 = vpack.c.b16 %v81, %v80
    %v95 = vpack.c.b16 %v83, %v82
    %v96 = vpack.c.b16 %v85, %v84
    %v97 = vpack.c.b16 %v87, %v86
    %v98 = vpack.c.b16 %v89, %v88
    %v99 = vpack.c.b16 %v91, %v90
    %108 = vmatprep.subr.bf16.mxu0 0
    %109 = vmatpush1.bf16.msra.mxu0 %v92
    %110 = vmatprep.subr.bf16.mxu0 0
    %111 = vmatpush1.bf16.msra.mxu0 %v93
    %112 = vmatprep.subr.bf16.mxu0 0
    %113 = vmatpush1.bf16.msra.mxu0 %v94
    %114 = vmatprep.subr.bf16.mxu0 0
    %115 = vmatpush1.bf16.msra.mxu0 %v95
    %116 = vmatprep.subr.bf16.mxu0 0
    %117 = vmatpush1.bf16.msra.mxu0 %v96
    %118 = vmatprep.subr.bf16.mxu0 0
    %119 = vmatpush1.bf16.msra.mxu0 %v97
    %120 = vmatprep.subr.bf16.mxu0 0
    %121 = vmatpush1.bf16.msra.mxu0 %v98
    %122 = vmatprep.subr.bf16.mxu0 0
    %123 = vmatpush1.bf16.msra.mxu0 %v99
    %124 = vmatprep.subr.bf16.mxu0 0
    %125 = vmatpush1.bf16.msra.mxu0 0
    %126 = vmatprep.subr.bf16.mxu0 0
    %127 = vmatpush1.bf16.msra.mxu0 0
    %128 = vmatprep.subr.bf16.mxu0 0
    %129 = vmatpush1.bf16.msra.mxu0 0
    %130 = vmatprep.subr.bf16.mxu0 0
    %131 = vmatpush1.bf16.msra.mxu0 0
    %132 = vmatprep.subr.bf16.mxu0 0
    %133 = vmatpush1.bf16.msra.mxu0 0
    %134 = vmatprep.subr.bf16.mxu0 0
    %135 = vmatpush1.bf16.msra.mxu0 0
    %136 = vmatprep.subr.bf16.mxu0 0
    %137 = vmatpush1.bf16.msra.mxu0 0
    %138 = vmatprep.subr.bf16.mxu0 0
    %139 = vmatpush1.bf16.msra.mxu0 0
    %140 = vmatprep.mubr.bf16.mxu0 0
    %141 = vmatmul.mubr.bf16.gmra.mrb[0].mxu0 %v58
    %v142 = vpop.f32.mrb[0].mxu0
    %v143 = vadd.f32 %v52, %v142
    %v144 = vpop.f32.mrb[0].mxu0
    %v145 = vpop.f32.mrb[0].mxu0
    %v146 = vadd.f32 %v52, %v145
    %v147 = vpop.f32.mrb[0].mxu0
    %148 = vdwg.mxu0
    %v149 = vmax.f32 %v143, 0.0
    %v150 = vmax.f32 %v146, 0.0
    %151 = vst [vmem:[%s3] sm:$0xff] %v149
    %152 = vst [vmem:[%s3 + $0x8] sm:$0xff] %v150
    // Predicated region
    $region18: #{linear_block_forward.1} parent=1 // pred_check
      _
    $region19: #{linear_block_forward.1} parent=1 // pred_check_branch
      %154 = sbr.rel (0) target = $region21
    $region20: #{linear_block_forward.1} parent=1 // pred_region
      _
    $region21: #{linear_block_forward.1} parent=1 // pred_fallthru
      _
    // Predicated region
    $region22: #{linear_block_forward.1} parent=1 // pred_check
      _
    $region23: #{linear_block_forward.1} parent=1 // pred_check_branch
      %156 = sbr.rel (0) target = $region25
    $region24: #{linear_block_forward.1} parent=1 // pred_region
      _
    $region25: #{linear_block_forward.1} parent=1 // pred_fallthru
      _
    %157 = vsyncpa [#allocation3], 1

</llo_original>
